<compile_context>
chip_gen: v5e
topology: v5e:2x2
jax: 0.10.0
libtpu: 0.0.40
codegen_flags: <defaults>
</compile_context>

<pallas_src>
import jax
import jax.numpy as jnp
from jax.experimental import pallas as pl
from jax.experimental.pallas import tpu as pltpu


def _round_up(x, m):
    return ((x + m - 1) // m) * m


def double_q_kernel(s_ref, w_ref, b_ref, out_ref):
    """Fused DoubleQNet forward: 3 MXU dots, f32 accumulate, f32 elementwise."""
    x = s_ref[...]                                             # (TILE_B, D) compute dtype

    # Layer 1: Linear + ReLU   (heads concatenated along output lanes)
    acc = jnp.dot(x, w_ref[0], preferred_element_type=jnp.float32)
    h = jnp.maximum(acc + b_ref[0:1, :], 0.0)

    # Layer 2: Linear + ReLU   (block-diagonal -> heads stay independent)
    acc = jnp.dot(h.astype(x.dtype), w_ref[1], preferred_element_type=jnp.float32)
    h = jnp.maximum(acc + b_ref[1:2, :], 0.0)

    # Layer 3: Linear + Identity (block-diagonal); single lane-dense store.
    acc = jnp.dot(h.astype(x.dtype), w_ref[2], preferred_element_type=jnp.float32)
    out_ref[...] = acc + b_ref[2:3, :]


def pack_double_q_params(params_q1, params_q2, d_pad, compute_dtype):
    """Pack both Q-heads into one padded weight slab (3, d_pad, d_pad) and one
    bias slab (8, d_pad). Off-diagonal blocks are explicit zeros, so the fused
    forward is exactly equivalent to running the two MLPs separately."""
    (w1a, b1a), (w2a, b2a), (w3a, b3a) = params_q1
    (w1b, b1b), (w2b, b2b), (w3b, b3b) = params_q2
    state_dim = w1a.shape[0]
    h1 = w1a.shape[1]
    h2 = w2a.shape[1]
    act = w3a.shape[1]
    assert max(state_dim, 2 * h1, 2 * h2, 2 * act) <= d_pad

    w = jnp.zeros((3, d_pad, d_pad), jnp.float32)
    # Layer 1: outputs concatenated  [head A | head B]
    w = w.at[0, :state_dim, :h1].set(w1a)
    w = w.at[0, :state_dim, h1:2 * h1].set(w1b)
    # Layer 2: block diagonal
    w = w.at[1, :h1, :h2].set(w2a)
    w = w.at[1, h1:2 * h1, h2:2 * h2].set(w2b)
    # Layer 3: block diagonal
    w = w.at[2, :h2, :act].set(w3a)
    w = w.at[2, h2:2 * h2, act:2 * act].set(w3b)

    b = jnp.zeros((8, d_pad), jnp.float32)
    b = b.at[0, :h1].set(b1a.reshape(-1))
    b = b.at[0, h1:2 * h1].set(b1b.reshape(-1))
    b = b.at[1, :h2].set(b2a.reshape(-1))
    b = b.at[1, h2:2 * h2].set(b2b.reshape(-1))
    b = b.at[2, :act].set(b3a.reshape(-1))
    b = b.at[2, act:2 * act].set(b3b.reshape(-1))

    return w.astype(compute_dtype), b  # weights in compute dtype, biases in f32


def double_q_forward(s, params_q1, params_q2, compute_dtype=jnp.bfloat16):
    """params_q* = [(W1, b1), (W2, b2), (W3, b3)] with W: (in, out), b: (1, out)."""
    batch, state_dim = s.shape
    h1 = params_q1[0][0].shape[1]
    h2 = params_q1[1][0].shape[1]
    action_dim = params_q1[-1][0].shape[1]

    # Lane-pad every feature dim to a multiple of 128 (fits both Q-heads side by side).
    d_pad = _round_up(max(state_dim, 2 * h1, 2 * h2, 2 * action_dim), 128)

    w_slab, b_slab = pack_double_q_params(params_q1, params_q2, d_pad, compute_dtype)

    # Batch tile: big enough for pipelining at RL batch sizes, 16-aligned for bf16
    # sublane packing; well under the 64 MiB VMEM budget of v7x.
    tile_b = min(256, _round_up(max(batch, 16), 16))
    b_pad = _round_up(batch, tile_b)

    s_pad = jnp.zeros((b_pad, d_pad), compute_dtype)
    s_pad = s_pad.at[:batch, :state_dim].set(s.astype(compute_dtype))

    grid = (b_pad // tile_b,)
    out = pl.pallas_call(
        double_q_kernel,
        out_shape=jax.ShapeDtypeStruct((b_pad, d_pad), jnp.float32),
        grid=grid,
        in_specs=[
            pl.BlockSpec((tile_b, d_pad), lambda i: (i, 0)),        # state tile
            pl.BlockSpec((3, d_pad, d_pad), lambda i: (0, 0, 0)),   # weight slab (VMEM-resident)
            pl.BlockSpec((8, d_pad), lambda i: (0, 0)),             # bias slab (VMEM-resident)
        ],
        out_specs=pl.BlockSpec((tile_b, d_pad), lambda i: (i, 0)),
        compiler_params=pltpu.CompilerParams(
            dimension_semantics=("parallel",)),                      # megacore split on v7x
    )(s_pad, w_slab, b_slab)

    q1 = out[:batch, :action_dim]
    q2 = out[:batch, action_dim:2 * action_dim]
    return q1, q2


def init_mlp_params(key, layer_sizes):
    """Deterministic init mimicking nn.Linear's uniform(-1/sqrt(fan_in), 1/sqrt(fan_in))."""
    params = []
    for j in range(len(layer_sizes) - 1):
        fan_in, fan_out = layer_sizes[j], layer_sizes[j + 1]
        key, kw, kb = jax.random.split(key, 3)
        bound = 1.0 / jnp.sqrt(jnp.float32(fan_in))
        w = jax.random.uniform(kw, (fan_in, fan_out), jnp.float32, -bound, bound)
        b = jax.random.uniform(kb, (1, fan_out), jnp.float32, -bound, bound)
        params.append((w, b))
    return params, key


def reference_forward(s, params, compute_dtype=jnp.float32):
    """Pure-JAX reference; `compute_dtype` lets us match the kernel's bf16 dots."""
    h = s
    for i, (w, b) in enumerate(params):
        h = jnp.dot(h.astype(compute_dtype), w.astype(compute_dtype),
                    preferred_element_type=jnp.float32) + b
        if i < len(params) - 1:
            h = jnp.maximum(h, 0.0)
    return h


if __name__ == "__main__":
    # Small shapes consistent with DoubleQNet(state_dim, action_dim, hidden_shape)
    batch = 2
    state_dim = 16
    action_dim = 8
    hidden_shape = (32, 32)
    layer_sizes = [state_dim] + list(hidden_shape) + [action_dim]

    key = jax.random.PRNGKey(0)
    key, ks = jax.random.split(key)
    s = jax.random.normal(ks, (batch, state_dim), jnp.float32)

    params_q1, key = init_mlp_params(key, layer_sizes)
    params_q2, key = init_mlp_params(key, layer_sizes)

    q1, q2 = double_q_forward(s, params_q1, params_q2, compute_dtype=jnp.bfloat16)
    jax.block_until_ready((q1, q2))

    assert q1.shape == (batch, action_dim) and q2.shape == (batch, action_dim)

    # Exact-math check against a reference that uses the same bf16-operand /
    # f32-accumulate dots as the kernel (fusion + zero padding is exact).
    q1_ref_bf16 = reference_forward(s, params_q1, jnp.bfloat16)
    q2_ref_bf16 = reference_forward(s, params_q2, jnp.bfloat16)
    assert jnp.allclose(q1, q1_ref_bf16, atol=1e-3, rtol=1e-3)
    assert jnp.allclose(q2, q2_ref_bf16, atol=1e-3, rtol=1e-3)

    # Loose sanity check against the full-f32 reference (bf16 operand rounding only).
    q1_ref_f32 = reference_forward(s, params_q1, jnp.float32)
    q2_ref_f32 = reference_forward(s, params_q2, jnp.float32)
    assert jnp.allclose(q1, q1_ref_f32, atol=5e-2, rtol=5e-2)
    assert jnp.allclose(q2, q2_ref_f32, atol=5e-2, rtol=5e-2)

    print("KERNEL_OK")
</pallas_src>

<mosaic_0001>
module attributes {stable_mosaic.version = 11 : i64} {
  func.func @double_q_kernel(%arg0: i32, %arg1: memref<16x128xbf16, #tpu.memory_space<vmem>>, %arg2: memref<3x128x128xbf16, #tpu.memory_space<vmem>>, %arg3: memref<8x128xf32, #tpu.memory_space<vmem>>, %arg4: memref<16x128xf32, #tpu.memory_space<vmem>>) attributes {dimension_semantics = [#tpu.dimension_semantics<parallel>], iteration_bounds = array<i64: 1>, scalar_prefetch = 0 : i64, scratch_operands = 0 : i64, tpu.core_type = #tpu.core_type<tc>, window_params = [{transform_indices = @transform_0, window_bounds = array<i64: 16, 128>}, {pipeline_mode = #tpu.pipeline_mode<synchronous>, transform_indices = @transform_1, window_bounds = array<i64: 3, 128, 128>}, {pipeline_mode = #tpu.pipeline_mode<synchronous>, transform_indices = @transform_2, window_bounds = array<i64: 8, 128>}, {transform_indices = @transform_3, window_bounds = array<i64: 16, 128>}]} {
    %c0 = arith.constant 0 : index
    %c0_0 = arith.constant 0 : index
    %0 = vector.load %arg1[%c0, %c0_0] : memref<16x128xbf16, #tpu.memory_space<vmem>>, vector<16x128xbf16>
    %c0_1 = arith.constant 0 : index
    %c0_2 = arith.constant 0 : index
    %c0_3 = arith.constant 0 : index
    %1 = vector.load %arg2[%c0_1, %c0_2, %c0_3] : memref<3x128x128xbf16, #tpu.memory_space<vmem>>, vector<1x128x128xbf16>
    %2 = vector.shape_cast %1 : vector<1x128x128xbf16> to vector<128x128xbf16>
    %cst = arith.constant dense<0.000000e+00> : vector<16x128xf32>
    %3 = tpu.matmul %0, %2, %cst {dimension_numbers = #tpu.dot_dimension_numbers<[1], [0], [0], [1], [0, 0, 1, 1], [], []>} : vector<16x128xbf16>, vector<128x128xbf16>, vector<16x128xf32> -> vector<16x128xf32>
    %c0_4 = arith.constant 0 : index
    %c0_5 = arith.constant 0 : index
    %4 = vector.load %arg3[%c0_4, %c0_5] : memref<8x128xf32, #tpu.memory_space<vmem>>, vector<1x128xf32>
    %5 = vector.broadcast %4 : vector<1x128xf32> to vector<16x128xf32>
    %6 = arith.addf %3, %5 : vector<16x128xf32>
    %cst_6 = arith.constant 0.000000e+00 : f32
    %7 = vector.broadcast %cst_6 : f32 to vector<16x128xf32>
    %8 = arith.maximumf %6, %7 : vector<16x128xf32>
    %9 = arith.truncf %8 : vector<16x128xf32> to vector<16x128xbf16>
    %c1 = arith.constant 1 : index
    %c0_7 = arith.constant 0 : index
    %c0_8 = arith.constant 0 : index
    %10 = vector.load %arg2[%c1, %c0_7, %c0_8] : memref<3x128x128xbf16, #tpu.memory_space<vmem>>, vector<1x128x128xbf16>
    %11 = vector.shape_cast %10 : vector<1x128x128xbf16> to vector<128x128xbf16>
    %cst_9 = arith.constant dense<0.000000e+00> : vector<16x128xf32>
    %12 = tpu.matmul %9, %11, %cst_9 {dimension_numbers = #tpu.dot_dimension_numbers<[1], [0], [0], [1], [0, 0, 1, 1], [], []>} : vector<16x128xbf16>, vector<128x128xbf16>, vector<16x128xf32> -> vector<16x128xf32>
    %c1_10 = arith.constant 1 : index
    %c0_11 = arith.constant 0 : index
    %13 = vector.load %arg3[%c1_10, %c0_11] : memref<8x128xf32, #tpu.memory_space<vmem>>, vector<1x128xf32>
    %14 = vector.broadcast %13 : vector<1x128xf32> to vector<16x128xf32>
    %15 = arith.addf %12, %14 : vector<16x128xf32>
    %cst_12 = arith.constant 0.000000e+00 : f32
    %16 = vector.broadcast %cst_12 : f32 to vector<16x128xf32>
    %17 = arith.maximumf %15, %16 : vector<16x128xf32>
    %18 = arith.truncf %17 : vector<16x128xf32> to vector<16x128xbf16>
    %c2 = arith.constant 2 : index
    %c0_13 = arith.constant 0 : index
    %c0_14 = arith.constant 0 : index
    %19 = vector.load %arg2[%c2, %c0_13, %c0_14] : memref<3x128x128xbf16, #tpu.memory_space<vmem>>, vector<1x128x128xbf16>
    %20 = vector.shape_cast %19 : vector<1x128x128xbf16> to vector<128x128xbf16>
    %cst_15 = arith.constant dense<0.000000e+00> : vector<16x128xf32>
    %21 = tpu.matmul %18, %20, %cst_15 {dimension_numbers = #tpu.dot_dimension_numbers<[1], [0], [0], [1], [0, 0, 1, 1], [], []>} : vector<16x128xbf16>, vector<128x128xbf16>, vector<16x128xf32> -> vector<16x128xf32>
    %c2_16 = arith.constant 2 : index
    %c0_17 = arith.constant 0 : index
    %22 = vector.load %arg3[%c2_16, %c0_17] : memref<8x128xf32, #tpu.memory_space<vmem>>, vector<1x128xf32>
    %23 = vector.broadcast %22 : vector<1x128xf32> to vector<16x128xf32>
    %24 = arith.addf %21, %23 : vector<16x128xf32>
    %c0_18 = arith.constant 0 : index
    %c0_19 = arith.constant 0 : index
    %25 = vector.load %arg4[%c0_18, %c0_19] : memref<16x128xf32, #tpu.memory_space<vmem>>, vector<16x128xf32>
    tpu.vector_store %arg4[%c0_18, %c0_19], %24 {strides = array<i32>} : memref<16x128xf32, #tpu.memory_space<vmem>>, vector<16x128xf32>,
    return
  }
  func.func @transform_0(%arg0: i32) -> (i32, i32) {
    %c0_i32 = arith.constant 0 : i32
    %c0_i32_0 = arith.constant 0 : i32
    return %arg0, %c0_i32 : i32, i32
  }
  func.func @transform_1(%arg0: i32) -> (i32, i32, i32) {
    %c0_i32 = arith.constant 0 : i32
    %c0_i32_0 = arith.constant 0 : i32
    %c0_i32_1 = arith.constant 0 : i32
    %c0_i32_2 = arith.constant 0 : i32
    return %c0_i32, %c0_i32_0, %c0_i32_1 : i32, i32, i32
  }
  func.func @transform_2(%arg0: i32) -> (i32, i32) {
    %c0_i32 = arith.constant 0 : i32
    %c0_i32_0 = arith.constant 0 : i32
    %c0_i32_1 = arith.constant 0 : i32
    return %c0_i32, %c0_i32_0 : i32, i32
  }
  func.func @transform_3(%arg0: i32) -> (i32, i32) {
    %c0_i32 = arith.constant 0 : i32
    %c0_i32_0 = arith.constant 0 : i32
    return %arg0, %c0_i32 : i32, i32
  }
}

</mosaic_0001>

<llo_original>
// kernel: tpu_custom_call.1
$region0: #{tpu_custom_call.1}
  #allocation0 [shape = 'u32[]', space=smem, size = 0x4, offset = 0x4, fixed_abs, tag = 'smem constant byte address 0x4 - core index']
  #allocation1 [shape = 'u32[72,128]{1,0:T(1,128)}', space=vmem, size = 0x9000, scoped, tag = 'internal scratch']
  %s0 = inlined_call_operand.hbm [shape: bf16[16,128], index: 0, kind: input, shape index: {}]
  %s1 = inlined_call_operand.hbm [shape: bf16[3,128,128], index: 1, kind: input, shape index: {}]
  %s2 = inlined_call_operand.hbm [shape: f32[8,128], index: 2, kind: input, shape index: {}]
  %s3 = inlined_call_operand.hbm [shape: f32[16,128], index: 3, kind: output, shape index: {}]
  %s4 = sld [smem:[#allocation0]]
  $region34: #{tpu_custom_call.1} parent=0
    _
  %s6 = ssub.s32 1, %s4
  %s7 = scalar_select 0, %s6, %s4
  $region1: #{tpu_custom_call.1} parent=0
    #allocation2 [shape = 'u8[4096]{0}', space=vmem, size = 0x1000, scoped, tag = 'input window, operand 0, single buffered']
    #allocation3 [shape = 's32[1]{0}', space=sflag, size = 0x4, scoped, tag = 'scoped memory for tpu_custom_call.1']
    #allocation4 [shape = 's32[1]{0}', space=sflag, size = 0x4, scoped, tag = 'scoped memory for tpu_custom_call.1']
    #allocation5 [shape = 'u8[98304]{0}', space=vmem, size = 0x18000, scoped, tag = 'input window, operand 1, single buffered']
    #allocation6 [shape = 's32[1]{0}', space=sflag, size = 0x4, scoped, tag = 'scoped memory for tpu_custom_call.1']
    #allocation7 [shape = 'u8[4096]{0}', space=vmem, size = 0x1000, scoped, tag = 'input window, operand 2, single buffered']
    #allocation8 [shape = 'u8[8192]{0}', space=vmem, size = 0x2000, scoped, tag = 'output window, operand 0, single buffered']
    %8 = vsyncpa [#allocation3], 0
    %9 = vsyncpa [#allocation6], 0
    %10 = vsyncpa [#allocation4], 0
    // Predicated region
    $region2: #{tpu_custom_call.1} parent=1 // pred_check
      _
    $region3: #{tpu_custom_call.1} parent=1 // pred_check_branch
      %12 = sbr.rel (0) target = $region5
    $region4: #{tpu_custom_call.1} parent=1 // pred_region
      %14 = vsyncadd [#allocation3], 0
      %s15 = sshll.u32 %s0, 4
      %s16 = int_to_ptr.hbm [resolvable:$true] %s15
      %s17 = sshll.u32 [#allocation2], 4
      %s18 = int_to_ptr.vmem [resolvable:$true] %s17
      %23 = dma.hbm_to_vmem [thread:$0]  %s16, 128, %s18, [#allocation3], 64, 64, 4
    $region5: #{tpu_custom_call.1} parent=1 // pred_fallthru
      _
    // Predicated region
    $region6: #{tpu_custom_call.1} parent=1 // pred_check
      _
    $region7: #{tpu_custom_call.1} parent=1 // pred_check_branch
      %25 = sbr.rel (0) target = $region9
    $region8: #{tpu_custom_call.1} parent=1 // pred_region
      %27 = vsyncadd [#allocation6], 0
      %s28 = sshll.u32 %s1, 4
      %s29 = int_to_ptr.hbm [resolvable:$true] %s28
      %s30 = sshll.u32 [#allocation5], 4
      %s31 = int_to_ptr.vmem [resolvable:$true] %s30
      %36 = dma.hbm_to_vmem [thread:$0]  %s29, 3072, %s31, [#allocation6], 64, 64, 4
    $region9: #{tpu_custom_call.1} parent=1 // pred_fallthru
      _
    // Predicated region
    $region10: #{tpu_custom_call.1} parent=1 // pred_check
      _
    $region11: #{tpu_custom_call.1} parent=1 // pred_check_branch
      %38 = sbr.rel (0) target = $region13
    $region12: #{tpu_custom_call.1} parent=1 // pred_region
      %40 = vsyncadd [#allocation6], 0
      %s42 = sshll.u32 %s2, 4
      %s43 = int_to_ptr.hbm [resolvable:$true] %s42
      %s44 = sshll.u32 [#allocation7], 4
      %s45 = int_to_ptr.vmem [resolvable:$true] %s44
      %47 = dma.hbm_to_vmem [thread:$0]  %s43, 128, %s45, [#allocation6]
    $region13: #{tpu_custom_call.1} parent=1 // pred_fallthru
      _
    // Predicated region
    $region14: #{tpu_custom_call.1} parent=1 // pred_check
      _
    $region15: #{tpu_custom_call.1} parent=1 // pred_check_branch
      %49 = sbr.rel (0) target = $region17
    $region16: #{tpu_custom_call.1} parent=1 // pred_region
      %51 = dma.done [#allocation3], 128
    $region17: #{tpu_custom_call.1} parent=1 // pred_fallthru
      _
    // Predicated region
    $region18: #{tpu_custom_call.1} parent=1 // pred_check
      _
    $region19: #{tpu_custom_call.1} parent=1 // pred_check_branch
      %53 = sbr.rel (0) target = $region21
    $region20: #{tpu_custom_call.1} parent=1 // pred_region
      %55 = dma.done [#allocation6], 3072
    $region21: #{tpu_custom_call.1} parent=1 // pred_fallthru
      _
    // Predicated region
    $region22: #{tpu_custom_call.1} parent=1 // pred_check
      _
    $region23: #{tpu_custom_call.1} parent=1 // pred_check_branch
      %57 = sbr.rel (0) target = $region25
    $region24: #{tpu_custom_call.1} parent=1 // pred_region
      %59 = dma.done [#allocation6], 128
    $region25: #{tpu_custom_call.1} parent=1 // pred_fallthru
      _
    %v60 = vld [vmem:[#allocation2] sm:$0xf]
    %v61 = vld [vmem:[#allocation2 + $0x4] sm:$0xf]
    %v62 = vld [vmem:[#allocation5] sm:$0xf]
    %v63 = vld [vmem:[#allocation5 + $0x4] sm:$0xf]
    %v64 = vld [vmem:[#allocation5 + $0x8] sm:$0xf]
    %v65 = vld [vmem:[#allocation5 + $0xc] sm:$0xf]
    %v66 = vld [vmem:[#allocation5 + $0x10] sm:$0xf]
    %v67 = vld [vmem:[#allocation5 + $0x14] sm:$0xf]
    %v68 = vld [vmem:[#allocation5 + $0x18] sm:$0xf]
    %v69 = vld [vmem:[#allocation5 + $0x1c] sm:$0xf]
    %v70 = vld [vmem:[#allocation5 + $0x20] sm:$0xf]
    %v71 = vld [vmem:[#allocation5 + $0x24] sm:$0xf]
    %v72 = vld [vmem:[#allocation5 + $0x28] sm:$0xf]
    %v73 = vld [vmem:[#allocation5 + $0x2c] sm:$0xf]
    %v74 = vld [vmem:[#allocation5 + $0x30] sm:$0xf]
    %v75 = vld [vmem:[#allocation5 + $0x34] sm:$0xf]
    %v76 = vld [vmem:[#allocation5 + $0x38] sm:$0xf]
    %v77 = vld [vmem:[#allocation5 + $0x3c] sm:$0xf]
    %v78 = vld [vmem:[#allocation7] sm:$0x1]
    %v79 = vperm.slane %v78, 0
    %v82 = vunpack.c.l.b16 %v60
    %v83 = vunpack.c.l.b16 %v61
    %v84 = vpack.c.b16 %v83, %v82
    %v102 = vunpack.c.l.b16 %v62
    %v103 = vunpack.c.l.b16 %v63
    %v104 = vunpack.c.l.b16 %v64
    %v105 = vunpack.c.l.b16 %v65
    %v106 = vunpack.c.l.b16 %v66
    %v107 = vunpack.c.l.b16 %v67
    %v108 = vunpack.c.l.b16 %v68
    %v109 = vunpack.c.l.b16 %v69
    %v110 = vunpack.c.l.b16 %v70
    %v111 = vunpack.c.l.b16 %v71
    %v112 = vunpack.c.l.b16 %v72
    %v113 = vunpack.c.l.b16 %v73
    %v114 = vunpack.c.l.b16 %v74
    %v115 = vunpack.c.l.b16 %v75
    %v116 = vunpack.c.l.b16 %v76
    %v117 = vunpack.c.l.b16 %v77
    %v118 = vpack.c.b16 %v103, %v102
    %v119 = vpack.c.b16 %v105, %v104
    %v120 = vpack.c.b16 %v107, %v106
    %v121 = vpack.c.b16 %v109, %v108
    %v122 = vpack.c.b16 %v111, %v110
    %v123 = vpack.c.b16 %v113, %v112
    %v124 = vpack.c.b16 %v115, %v114
    %v125 = vpack.c.b16 %v117, %v116
    %134 = vmatpush.bf16.msra.mxu0 %v125
    %135 = vmatpush.bf16.msra.mxu0 %v124
    %136 = vmatpush.bf16.msra.mxu0 %v123
    %137 = vmatpush.bf16.msra.mxu0 %v122
    %138 = vmatpush.bf16.msra.mxu0 %v121
    %139 = vmatpush.bf16.msra.mxu0 %v120
    %140 = vmatpush.bf16.msra.mxu0 %v119
    %141 = vmatpush.bf16.msra.mxu0 %v118
    %142 = vmatmul.bf16.gmra.mxu0 %v84
    %v143 = vpop.f32.mrf.mxu0
    %v144 = vadd.f32 %v79, %v143
    %v145 = vpop.f32.mrf.mxu0
    %v146 = vadd.f32 %v79, %v145
    %147 = vdwg.mxu0
    %v148 = vmax.f32 %v144, 0.0
    %v149 = vmax.f32 %v146, 0.0
    %v150 = vpack.c.bf16 %v149, %v148
    %s151 = scalar_lea.vmem [#allocation5], 64
    %v152 = vld [vmem:[%s151] sm:$0xf]
    %v153 = vld [vmem:[%s151 + $0x4] sm:$0xf]
    %v154 = vld [vmem:[%s151 + $0x8] sm:$0xf]
    %v155 = vld [vmem:[%s151 + $0xc] sm:$0xf]
    %v156 = vld [vmem:[%s151 + $0x10] sm:$0xf]
    %v157 = vld [vmem:[%s151 + $0x14] sm:$0xf]
    %v158 = vld [vmem:[%s151 + $0x18] sm:$0xf]
    %v159 = vld [vmem:[%s151 + $0x1c] sm:$0xf]
    %v160 = vld [vmem:[%s151 + $0x20] sm:$0xf]
    %v161 = vld [vmem:[%s151 + $0x24] sm:$0xf]
    %v162 = vld [vmem:[%s151 + $0x28] sm:$0xf]
    %v163 = vld [vmem:[%s151 + $0x2c] sm:$0xf]
    %v164 = vld [vmem:[%s151 + $0x30] sm:$0xf]
    %v165 = vld [vmem:[%s151 + $0x34] sm:$0xf]
    %v166 = vld [vmem:[%s151 + $0x38] sm:$0xf]
    %v167 = vld [vmem:[%s151 + $0x3c] sm:$0xf]
    %v168 = vld [vmem:[#allocation7 + $0x1] sm:$0x1]
    %v169 = vperm.slane %v168, 0
    %v186 = vunpack.c.l.b16 %v152
    %v187 = vunpack.c.l.b16 %v153
    %v188 = vunpack.c.l.b16 %v154
    %v189 = vunpack.c.l.b16 %v155
    %v190 = vunpack.c.l.b16 %v156
    %v191 = vunpack.c.l.b16 %v157
    %v192 = vunpack.c.l.b16 %v158
    %v193 = vunpack.c.l.b16 %v159
    %v194 = vunpack.c.l.b16 %v160
    %v195 = vunpack.c.l.b16 %v161
    %v196 = vunpack.c.l.b16 %v162
    %v197 = vunpack.c.l.b16 %v163
    %v198 = vunpack.c.l.b16 %v164
    %v199 = vunpack.c.l.b16 %v165
    %v200 = vunpack.c.l.b16 %v166
    %v201 = vunpack.c.l.b16 %v167
    %v202 = vpack.c.b16 %v187, %v186
    %v203 = vpack.c.b16 %v189, %v188
    %v204 = vpack.c.b16 %v191, %v190
    %v205 = vpack.c.b16 %v193, %v192
    %v206 = vpack.c.b16 %v195, %v194
    %v207 = vpack.c.b16 %v197, %v196
    %v208 = vpack.c.b16 %v199, %v198
    %v209 = vpack.c.b16 %v201, %v200
    %218 = vmatpush.bf16.msra.mxu0 %v209
    %219 = vmatpush.bf16.msra.mxu0 %v208
    %220 = vmatpush.bf16.msra.mxu0 %v207
    %221 = vmatpush.bf16.msra.mxu0 %v206
    %222 = vmatpush.bf16.msra.mxu0 %v205
    %223 = vmatpush.bf16.msra.mxu0 %v204
    %224 = vmatpush.bf16.msra.mxu0 %v203
    %225 = vmatpush.bf16.msra.mxu0 %v202
    %226 = vmatmul.bf16.gmra.mxu0 %v150
    %v227 = vpop.f32.mrf.mxu0
    %v228 = vadd.f32 %v169, %v227
    %v229 = vpop.f32.mrf.mxu0
    %v230 = vadd.f32 %v169, %v229
    %231 = vdwg.mxu0
    %v232 = vmax.f32 %v228, 0.0
    %v233 = vmax.f32 %v230, 0.0
    %v234 = vpack.c.bf16 %v233, %v232
    %s235 = scalar_lea.vmem [#allocation5], 128
    %v236 = vld [vmem:[%s235] sm:$0xf]
    %v237 = vld [vmem:[%s235 + $0x4] sm:$0xf]
    %v238 = vld [vmem:[%s235 + $0x8] sm:$0xf]
    %v239 = vld [vmem:[%s235 + $0xc] sm:$0xf]
    %v240 = vld [vmem:[%s235 + $0x10] sm:$0xf]
    %v241 = vld [vmem:[%s235 + $0x14] sm:$0xf]
    %v242 = vld [vmem:[%s235 + $0x18] sm:$0xf]
    %v243 = vld [vmem:[%s235 + $0x1c] sm:$0xf]
    %v244 = vld [vmem:[%s235 + $0x20] sm:$0xf]
    %v245 = vld [vmem:[%s235 + $0x24] sm:$0xf]
    %v246 = vld [vmem:[%s235 + $0x28] sm:$0xf]
    %v247 = vld [vmem:[%s235 + $0x2c] sm:$0xf]
    %v248 = vld [vmem:[%s235 + $0x30] sm:$0xf]
    %v249 = vld [vmem:[%s235 + $0x34] sm:$0xf]
    %v250 = vld [vmem:[%s235 + $0x38] sm:$0xf]
    %v251 = vld [vmem:[%s235 + $0x3c] sm:$0xf]
    %v252 = vld [vmem:[#allocation7 + $0x2] sm:$0x1]
    %v253 = vperm.slane %v252, 0
    %v270 = vunpack.c.l.b16 %v236
    %v271 = vunpack.c.l.b16 %v237
    %v272 = vunpack.c.l.b16 %v238
    %v273 = vunpack.c.l.b16 %v239
    %v274 = vunpack.c.l.b16 %v240
    %v275 = vunpack.c.l.b16 %v241
    %v276 = vunpack.c.l.b16 %v242
    %v277 = vunpack.c.l.b16 %v243
    %v278 = vunpack.c.l.b16 %v244
    %v279 = vunpack.c.l.b16 %v245
    %v280 = vunpack.c.l.b16 %v246
    %v281 = vunpack.c.l.b16 %v247
    %v282 = vunpack.c.l.b16 %v248
    %v283 = vunpack.c.l.b16 %v249
    %v284 = vunpack.c.l.b16 %v250
    %v285 = vunpack.c.l.b16 %v251
    %v286 = vpack.c.b16 %v271, %v270
    %v287 = vpack.c.b16 %v273, %v272
    %v288 = vpack.c.b16 %v275, %v274
    %v289 = vpack.c.b16 %v277, %v276
    %v290 = vpack.c.b16 %v279, %v278
    %v291 = vpack.c.b16 %v281, %v280
    %v292 = vpack.c.b16 %v283, %v282
    %v293 = vpack.c.b16 %v285, %v284
    %302 = vmatpush.bf16.msra.mxu0 %v293
    %303 = vmatpush.bf16.msra.mxu0 %v292
    %304 = vmatpush.bf16.msra.mxu0 %v291
    %305 = vmatpush.bf16.msra.mxu0 %v290
    %306 = vmatpush.bf16.msra.mxu0 %v289
    %307 = vmatpush.bf16.msra.mxu0 %v288
    %308 = vmatpush.bf16.msra.mxu0 %v287
    %309 = vmatpush.bf16.msra.mxu0 %v286
    %310 = vmatmul.bf16.gmra.mxu0 %v234
    %v311 = vpop.f32.mrf.mxu0
    %v312 = vadd.f32 %v253, %v311
    %v313 = vpop.f32.mrf.mxu0
    %v314 = vadd.f32 %v253, %v313
    %315 = vdwg.mxu0
    %316 = vst [vmem:[#allocation8] sm:$0xff] %v312
    %317 = vst [vmem:[#allocation8 + $0x8] sm:$0xff] %v314
    // Predicated region
    $region26: #{tpu_custom_call.1} parent=1 // pred_check
      _
    $region27: #{tpu_custom_call.1} parent=1 // pred_check_branch
      %319 = sbr.rel (0) target = $region29
    $region28: #{tpu_custom_call.1} parent=1 // pred_region
      %321 = vsyncadd [#allocation4], 0
      %s322 = sshll.u32 [#allocation8], 4
      %s323 = int_to_ptr.vmem [resolvable:$true] %s322
      %s324 = sshll.u32 %s3, 4
      %s325 = int_to_ptr.hbm [resolvable:$true] %s324
      %330 = dma.vmem_to_hbm [thread:$0]  %s323, 256, %s325, [#allocation4], 128, 128, 8
    $region29: #{tpu_custom_call.1} parent=1 // pred_fallthru
      _
    // Predicated region
    $region30: #{tpu_custom_call.1} parent=1 // pred_check
      _
    $region31: #{tpu_custom_call.1} parent=1 // pred_check_branch
      %332 = sbr.rel (0) target = $region33
    $region32: #{tpu_custom_call.1} parent=1 // pred_region
      %334 = dma.done [#allocation4], 256
    $region33: #{tpu_custom_call.1} parent=1 // pred_fallthru
      _
    %335 = vsyncpa [#allocation3], 1
    %336 = vsyncpa [#allocation6], 1
    %337 = vsyncpa [#allocation4], 1

</llo_original>
